<compile_context>
chip_gen: v7x
topology: tpu7x:2x2x1
jax: 0.10.0
libtpu: 0.0.40
codegen_flags: <defaults>
</compile_context>

<pallas_src>
import jax
import jax.numpy as jnp
from jax.experimental import pallas as pl
from jax.experimental.pallas import tpu as pltpu


def _dispact_kernel(x_ref, o_ref):
    # Compute in f32 regardless of I/O dtype (stable, and v5e has no bf16 VPU/EUP).
    x = x_ref[...].astype(jnp.float32)
    # Numerically stable softplus (matches torch.nn.functional.softplus, beta=1):
    #   softplus(x) = max(x, 0) + log1p(exp(-|x|))
    sp = jnp.maximum(x, 0.0) + jnp.log1p(jnp.exp(-jnp.abs(x)))
    o_ref[...] = jnp.clip(sp, 1e-4, 1e4).astype(o_ref.dtype)


def _choose_layout(n, itemsize, target_block_bytes):
    """Pick (width, rows, block_rows, padded_n) for a lane-dense 2D slab.

    Prefers a wide last dim that exactly divides n (so no padding copy) and a
    block_rows that exactly divides rows (so grid * block == array, no
    truncation and no partial blocks).
    """
    lanes = 128
    width = None
    for w in (4096, 2048, 1024, 512, 256, 128):
        if n % w == 0:
            width = w
            break
    if width is None:
        width = lanes  # ragged size: pad up to a multiple of 128 (< 128 elems)
    padded_n = ((n + width - 1) // width) * width
    rows = padded_n // width

    total_bytes = rows * width * itemsize
    if total_bytes <= target_block_bytes or rows <= 8:
        # Small array: a single block covering the full array is always legal.
        return width, rows, rows, padded_n

    # Largest multiple-of-8 row count that keeps the block under the byte cap.
    max_block_rows = max(8, (target_block_bytes // (width * itemsize)) // 8 * 8)
    block_rows = None
    r = min(max_block_rows, (rows // 8) * 8)
    while r >= 8:
        if rows % r == 0:
            block_rows = r
            break
        r -= 8
    if block_rows is None:
        # Rare (rows has no multiple-of-8 divisor in range): pad rows up so the
        # grid divides exactly. Padding is sliced off after the kernel.
        block_rows = max_block_rows
        rows = ((rows + block_rows - 1) // block_rows) * block_rows
        padded_n = rows * width
    return width, rows, block_rows, padded_n


def dispact(x: jax.Array, *, target_block_bytes: int = 2 * 1024 * 1024) -> jax.Array:
    """Applies clamp(softplus(x), 1e-4, 1e4) elementwise via a Pallas TPU kernel."""
    orig_shape = x.shape
    orig_dtype = x.dtype
    n = x.size
    if n == 0:
        return x

    itemsize = jnp.dtype(orig_dtype).itemsize
    width, rows, block_rows, padded_n = _choose_layout(n, itemsize, target_block_bytes)

    flat = x.reshape(-1)
    if padded_n != n:
        # Only for ragged sizes; common activation shapes hit the no-copy path.
        flat = jnp.pad(flat, (0, padded_n - n))
    x2d = flat.reshape(rows, width)

    grid = (rows // block_rows,)
    # NOTE: input_output_aliases={0: 0} would let XLA reuse the input buffer,
    # but is only safe if the caller donates x; left off for a general wrapper.
    out2d = pl.pallas_call(
        _dispact_kernel,
        out_shape=jax.ShapeDtypeStruct((rows, width), orig_dtype),
        grid_spec=pltpu.PrefetchScalarGridSpec(
            num_scalar_prefetch=0,
            grid=grid,
            in_specs=[pl.BlockSpec((block_rows, width), lambda i: (i, 0))],
            out_specs=pl.BlockSpec((block_rows, width), lambda i: (i, 0)),
        ),
        compiler_params=pltpu.CompilerParams(
            dimension_semantics=("parallel",)),
    )(x2d)

    if padded_n != n:
        return out2d.reshape(-1)[:n].reshape(orig_shape)
    return out2d.reshape(orig_shape)


def _dispact_ref(x):
    return jnp.clip(jax.nn.softplus(x.astype(jnp.float32)), 1e-4, 1e4).astype(x.dtype)


if __name__ == "__main__":
    key = jax.random.PRNGKey(0)

    # f32 NCHW activations (typical DispAct input).
    x = jax.random.normal(key, (2, 4, 16, 16), dtype=jnp.float32) * 5.0
    y = dispact(x)
    jax.block_until_ready(y)
    y_ref = _dispact_ref(x)
    assert y.shape == x.shape and y.dtype == x.dtype
    assert jnp.allclose(y, y_ref, rtol=1e-5, atol=1e-6), "f32 mismatch vs reference"

    # bf16 path: HBM I/O stays bf16, compute in f32 in-kernel.
    xb = (jax.random.normal(jax.random.PRNGKey(1), (2, 4, 16, 16)) * 5.0).astype(jnp.bfloat16)
    yb = dispact(xb)
    jax.block_until_ready(yb)
    yb_ref = _dispact_ref(xb)
    assert yb.dtype == jnp.bfloat16
    assert jnp.allclose(yb.astype(jnp.float32), yb_ref.astype(jnp.float32),
                        rtol=1e-2, atol=1e-3), "bf16 mismatch vs reference"

    # Ragged size (exercises the padding fallback path).
    xr = jax.random.normal(jax.random.PRNGKey(2), (3, 5, 7), dtype=jnp.float32) * 5.0
    yr = dispact(xr)
    jax.block_until_ready(yr)
    assert jnp.allclose(yr, _dispact_ref(xr), rtol=1e-5, atol=1e-6), "ragged mismatch"

    print("KERNEL_OK")
</pallas_src>

<mosaic_0001>
module attributes {stable_mosaic.version = 11 : i64} {
  func.func @_dispact_kernel(%arg0: i32, %arg1: memref<1x2048xf32, #tpu.memory_space<vmem>>, %arg2: memref<1x2048xf32, #tpu.memory_space<vmem>>) attributes {dimension_semantics = [#tpu.dimension_semantics<parallel>], iteration_bounds = array<i64: 1>, scalar_prefetch = 0 : i64, scratch_operands = 0 : i64, tpu.core_type = #tpu.core_type<tc>, window_params = [{transform_indices = @transform_0, window_bounds = array<i64: 1, 2048>}, {transform_indices = @transform_1, window_bounds = array<i64: 1, 2048>}]} {
    %c0 = arith.constant 0 : index
    %c0_0 = arith.constant 0 : index
    %0 = vector.load %arg1[%c0, %c0_0] : memref<1x2048xf32, #tpu.memory_space<vmem>>, vector<1x2048xf32>
    %cst = arith.constant 0.000000e+00 : f32
    %1 = vector.broadcast %cst : f32 to vector<1x2048xf32>
    %2 = arith.maximumf %0, %1 : vector<1x2048xf32>
    %3 = math.absf %0 : vector<1x2048xf32>
    %cst_1 = arith.constant 0.000000e+00 : f32
    %4 = vector.broadcast %cst_1 : f32 to vector<1x2048xf32>
    %5 = arith.subf %4, %3 : vector<1x2048xf32>
    %6 = math.exp %5 : vector<1x2048xf32>
    %7 = math.log1p %6 : vector<1x2048xf32>
    %8 = arith.addf %2, %7 : vector<1x2048xf32>
    %cst_2 = arith.constant 9.99999974E-5 : f32
    %cst_3 = arith.constant 1.000000e+04 : f32
    %9 = vector.broadcast %cst_2 : f32 to vector<1x2048xf32>
    %10 = arith.maximumf %9, %8 : vector<1x2048xf32>
    %11 = vector.broadcast %cst_3 : f32 to vector<1x2048xf32>
    %12 = arith.minimumf %11, %10 : vector<1x2048xf32>
    %c0_4 = arith.constant 0 : index
    %c0_5 = arith.constant 0 : index
    %13 = vector.load %arg2[%c0_4, %c0_5] : memref<1x2048xf32, #tpu.memory_space<vmem>>, vector<1x2048xf32>
    tpu.vector_store %arg2[%c0_4, %c0_5], %12 {strides = array<i32>} : memref<1x2048xf32, #tpu.memory_space<vmem>>, vector<1x2048xf32>,
    return
  }
  func.func @transform_0(%arg0: i32) -> (i32, i32) {
    %c0_i32 = arith.constant 0 : i32
    %c0_i32_0 = arith.constant 0 : i32
    return %arg0, %c0_i32 : i32, i32
  }
  func.func @transform_1(%arg0: i32) -> (i32, i32) {
    %c0_i32 = arith.constant 0 : i32
    %c0_i32_0 = arith.constant 0 : i32
    return %arg0, %c0_i32 : i32, i32
  }
}

</mosaic_0001>

<llo_original>
// kernel: tpu_custom_call.1
$region0: #{tpu_custom_call.1}
  #allocation0 [shape = 'u32[]', space=smem, size = 0x4, offset = 0x4, fixed_abs, tag = 'smem constant byte address 0x4 - core index']
  #allocation1 [shape = 'u32[144,128]{1,0:T(1,128)}', space=vmem, size = 0x12000, scoped, tag = 'internal scratch']
  %s0 = inlined_call_operand.hbm [shape: f32[1,2048], index: 0, kind: input, shape index: {}]
  %s1 = inlined_call_operand.hbm [shape: f32[1,2048], index: 1, kind: output, shape index: {}]
  %s2 = sld [smem:[#allocation0]]
  $region18: #{tpu_custom_call.1} parent=0
    _
  %s4 = ssub.s32 1, %s2
  %s5 = scalar_select 0, %s4, %s2
  $region1: #{tpu_custom_call.1} parent=0
    #allocation2 [shape = 'u8[8192]{0}', space=vmem, size = 0x2000, scoped, tag = 'input window, operand 0, single buffered']
    #allocation3 [shape = 's32[1]{0}', space=sflag, size = 0x4, scoped, tag = 'scoped memory for tpu_custom_call.1']
    #allocation4 [shape = 's32[1]{0}', space=sflag, size = 0x4, scoped, tag = 'scoped memory for tpu_custom_call.1']
    #allocation5 [shape = 'u8[8192]{0}', space=vmem, size = 0x2000, scoped, tag = 'output window, operand 0, single buffered']
    %6 = vsyncpa [#allocation3], 0
    %7 = vsyncpa [#allocation4], 0
    // Predicated region
    $region2: #{tpu_custom_call.1} parent=1 // pred_check
      _
    $region3: #{tpu_custom_call.1} parent=1 // pred_check_branch
      %9 = sbr.rel (0) target = $region5
    $region4: #{tpu_custom_call.1} parent=1 // pred_region
      %s11 = ssub.s32 256, 256
      %12 = vsyncadd [#allocation3], %s11
      %s14 = sshll.u32 [#allocation2], 4
      %s15 = int_to_ptr.vmem [resolvable:$true] %s14
      %17 = dma.hbm_to_vmem [thread:$0]  %s0, 256, %s15, [#allocation3]
    $region5: #{tpu_custom_call.1} parent=1 // pred_fallthru
      _
    // Predicated region
    $region6: #{tpu_custom_call.1} parent=1 // pred_check
      _
    $region7: #{tpu_custom_call.1} parent=1 // pred_check_branch
      %19 = sbr.rel (0) target = $region9
    $region8: #{tpu_custom_call.1} parent=1 // pred_region
      %20 = dma.done [#allocation3], 256
    $region9: #{tpu_custom_call.1} parent=1 // pred_fallthru
      _
    %v21 = vld [vmem:[#allocation2] sm:$0xff]
    %v22 = vld [vmem:[#allocation2 + $0x8] sm:$0xff]
    %v23 = vmax.f32 %v21, 0.0
    %v24 = vmax.f32 %v22, 0.0
    %v25 = vand.u32 2147483647, %v21
    %v26 = vand.u32 2147483647, %v22
    %v27 = vsub.f32 0.0, %v25
    %v28 = vsub.f32 0.0, %v26
    %v29 = vmul.f32 %v27, 1.442695
    %v30 = vpow.pop %v29
    %v31 = vmul.f32 %v28, 1.442695
    %v32 = vpow.pop %v31
    %v33 = vadd.f32 %v30, 1.0
    %v34 = vlog2.pop %v33
    %v35 = vmul.f32 %v34, 0.6931472
    %v36 = vmul.f32 -0.5, %v30
    %v37 = vadd.f32 %v36, 1.0
    %v38 = vmul.f32 %v37, %v30
    %v39 = vand.u32 2147483647, %v30
    %vm40 = vcmp.lt.f32.partialorder %v39, 0.0004427343
    %v41 = vsel %vm40, %v38, %v35
    %v42 = vadd.f32 %v32, 1.0
    %v43 = vlog2.pop %v42
    %v44 = vmul.f32 %v43, 0.6931472
    %v45 = vmul.f32 -0.5, %v32
    %v46 = vadd.f32 %v45, 1.0
    %v47 = vmul.f32 %v46, %v32
    %v48 = vand.u32 2147483647, %v32
    %vm49 = vcmp.lt.f32.partialorder %v48, 0.0004427343
    %v50 = vsel %vm49, %v47, %v44
    %v51 = vadd.f32 %v23, %v41
    %v52 = vadd.f32 %v24, %v50
    %v53 = vmax.f32 %v51, 0.0001
    %v54 = vmax.f32 %v52, 0.0001
    %v55 = vmin.f32 %v53, 10000.0
    %v56 = vmin.f32 %v54, 10000.0
    %57 = vst [vmem:[#allocation5] sm:$0xff] %v55
    %58 = vst [vmem:[#allocation5 + $0x8] sm:$0xff] %v56
    // Predicated region
    $region10: #{tpu_custom_call.1} parent=1 // pred_check
      _
    $region11: #{tpu_custom_call.1} parent=1 // pred_check_branch
      %60 = sbr.rel (0) target = $region13
    $region12: #{tpu_custom_call.1} parent=1 // pred_region
      %s62 = ssub.s32 256, 256
      %63 = vsyncadd [#allocation4], %s62
      %s65 = sshll.u32 [#allocation5], 4
      %s66 = int_to_ptr.vmem [resolvable:$true] %s65
      %68 = dma.vmem_to_hbm [thread:$0]  %s66, 256, %s1, [#allocation4]
    $region13: #{tpu_custom_call.1} parent=1 // pred_fallthru
      _
    // Predicated region
    $region14: #{tpu_custom_call.1} parent=1 // pred_check
      _
    $region15: #{tpu_custom_call.1} parent=1 // pred_check_branch
      %70 = sbr.rel (0) target = $region17
    $region16: #{tpu_custom_call.1} parent=1 // pred_region
      %71 = dma.done [#allocation4], 256
    $region17: #{tpu_custom_call.1} parent=1 // pred_fallthru
      _
    %72 = vsyncpa [#allocation3], 1
    %73 = vsyncpa [#allocation4], 1

</llo_original>
